<compile_context>
chip_gen: v6e
topology: v6e:2x2x1
jax: 0.10.0
libtpu: 0.0.40
codegen_flags: <defaults>
</compile_context>

<pallas_src>
import inspect

import jax
import jax.numpy as jnp
from jax.experimental import pallas as pl
from jax.experimental.pallas import tpu as pltpu


def map_pred_kernel(x_ref, w1_ref, b1_ref, w2_ref, b2_ref, o_ref):
    # Layer 1 on the MXU, f32 accumulation: (tile_b, in) @ (in, H) -> (tile_b, H).
    y1 = jnp.dot(x_ref[...], w1_ref[...], preferred_element_type=jnp.float32)
    # Dropout is identity at inference time; bias add + ReLU in f32 on the VPU.
    # TODO(synk): training-mode dropout (random mask) not implemented; eval semantics used.
    y1 = jnp.maximum(y1 + b1_ref[...], 0.0)
    # Layer 2 (output width 1): contract hidden on BOTH operands (NT contraction)
    # so the per-tile result is the lane-dense row (1, tile_b) rather than a
    # (tile_b, 1) column that would force masked partial stores.
    y2 = jax.lax.dot_general(
        w2_ref[...], y1,                       # (1, H) x (tile_b, H) -> (1, tile_b)
        dimension_numbers=(((1,), (1,)), ((), ())),
        preferred_element_type=jnp.float32)
    o_ref[...] = (y2 + b2_ref[0, 0]).astype(o_ref.dtype)


def _ceil_to(a, m):
    return ((a + m - 1) // m) * m


def map_pred_forward(x, w1, b1, w2, b2, *, max_tile_b=65536):
    """x: (B, in_size), w1: (in_size, H), b1: (H,), w2: (H, 1), b2: (1,)
    Returns: (B,) float32 — matches torch.reshape(n2(relu(n1(x))), [-1])."""
    B, in_size = x.shape
    H = w1.shape[1]

    # bf16 matmul only if x is *already* bf16 upstream (no wrapper cast of x);
    # the tiny w1 is cast to match.  Bias/ReLU/layer-2 stay f32 on all generations.
    compute_dtype = jnp.bfloat16 if x.dtype == jnp.bfloat16 else jnp.float32
    w1c = w1.astype(compute_dtype)
    x_item = x.dtype.itemsize
    w_item = jnp.dtype(compute_dtype).itemsize

    b1_2d = b1.reshape(1, H).astype(jnp.float32)
    w2_row = w2.reshape(1, H).astype(jnp.float32)   # (H, 1) -> (1, H) row
    b2_2d = b2.reshape(1, 1).astype(jnp.float32)

    # ---- adaptive tile_b under a per-generation VMEM budget (lane padding included) ----
    in_pad = _ceil_to(in_size, 128)     # minor dim pads toward 128 lanes in VMEM
    h_pad = _ceil_to(H, 128)
    try:
        vmem_cap = int(pltpu.get_tpu_info().vmem_capacity_bytes)
    except Exception:
        vmem_cap = 64 << 20             # conservative fallback (v7x physical VMEM)
    budget = int(vmem_cap * 0.55)       # leave headroom for compiler scratch

    n_xbuf = 3                          # streamed x gets up to triple buffering
    fixed = 2 * in_pad * h_pad * w_item + 4 * 8 * h_pad * 4      # resident w1 + b1/w2 rows
    per_row = n_xbuf * in_pad * x_item + h_pad * 4 + 2 * 8 * 4   # x bufs + y1 interm + out
    # TODO(synk): if w1 alone exceeds the budget (huge in_size on v7x), add an
    # "arbitrary" K grid axis with a (tile_b, H) f32 accumulator instead of shrinking tile_b.
    tile_cap = max((budget - fixed) // per_row, 128)
    tile_b = max(128, (min(int(max_tile_b), int(tile_cap)) // 128) * 128)

    if B <= tile_b:
        # Single tile: block == full array dims everywhere (no overhang, no padding).
        tile_b = B
        num_tiles = 1
    else:
        num_tiles = int(pl.cdiv(B, tile_b))   # last x block is a partial read (no jnp.pad)
    b_out = num_tiles * tile_b                # padded output is allocated by pallas_call

    # Explicit VMEM limit sized to the actual (lane/sublane-padded) footprint.
    tb_sub = _ceil_to(max(tile_b, 8), 8)
    footprint = (n_xbuf * tb_sub * in_pad * x_item     # x buffers
                 + 2 * in_pad * h_pad * w_item         # w1 (double-buffer counted)
                 + 4 * 8 * h_pad * 4                   # b1, w2 rows
                 + tb_sub * h_pad * 4                  # y1 intermediate
                 + 2 * 8 * tile_b * 4)                 # output buffers
    vmem_limit = min(vmem_cap, max(32 << 20, int(footprint * 1.5) + (2 << 20)))

    # Streamed x: request 3-deep pipelining when this jax supports pipeline_mode.
    x_spec_kwargs = {}
    if num_tiles > 1:
        try:
            if hasattr(pl, "Buffered") and \
               "pipeline_mode" in inspect.signature(pl.BlockSpec).parameters:
                x_spec_kwargs["pipeline_mode"] = pl.Buffered(3)
        except (TypeError, ValueError):
            pass
    x_spec = pl.BlockSpec((tile_b, in_size), lambda i: (i, 0), **x_spec_kwargs)

    cost = pl.CostEstimate(
        flops=2 * B * in_size * H + 2 * B * H,
        transcendentals=0,
        bytes_accessed=(B * in_size * x_item          # x (streamed)
                        + in_size * H * w_item        # w1 (resident)
                        + (2 * H + 1) * 4             # b1, w2, b2
                        + B * 4))                     # output

    out = pl.pallas_call(
        map_pred_kernel,
        out_shape=jax.ShapeDtypeStruct((1, b_out), jnp.float32),
        grid=(num_tiles,),
        in_specs=[
            x_spec,                                              # x: one tile per step
            pl.BlockSpec((in_size, H), lambda i: (0, 0)),        # w1: fetched once, resident
            pl.BlockSpec((1, H), lambda i: (0, 0)),              # b1: resident
            pl.BlockSpec((1, H), lambda i: (0, 0)),              # w2 row: resident
            pl.BlockSpec(memory_space=pltpu.MemorySpace.SMEM),   # b2 scalar in SMEM
        ],
        out_specs=pl.BlockSpec((1, tile_b), lambda i: (0, i)),   # lane-dense output row
        compiler_params=pltpu.CompilerParams(
            # TODO(synk): on v7x, if profiling shows one idle TensorCore, switch the
            # batch axis to pltpu.CORE_PARALLEL (plain "parallel" may not split TCs).
            dimension_semantics=("parallel",),
            vmem_limit_bytes=int(vmem_limit)),
        cost_estimate=cost,
    )(x, w1c, b1_2d, w2_row, b2_2d)

    return out.reshape(-1)[:B]


def init_params(key, in_size, hidden_size):
    """Deterministic PyTorch-style uniform(-1/sqrt(fan_in), 1/sqrt(fan_in)) init."""
    k1, k2, k3, k4 = jax.random.split(key, 4)
    bound1 = 1.0 / jnp.sqrt(jnp.float32(in_size))
    bound2 = 1.0 / jnp.sqrt(jnp.float32(hidden_size))
    w1 = jax.random.uniform(k1, (in_size, hidden_size), jnp.float32, -bound1, bound1)
    b1 = jax.random.uniform(k2, (hidden_size,), jnp.float32, -bound1, bound1)
    w2 = jax.random.uniform(k3, (hidden_size, 1), jnp.float32, -bound2, bound2)
    b2 = jax.random.uniform(k4, (1,), jnp.float32, -bound2, bound2)
    return w1, b1, w2, b2


def _ref_forward(x, w1, b1, w2, b2):
    return (jnp.maximum(x @ w1 + b1, 0.0) @ w2 + b2).reshape(-1)


if __name__ == "__main__":
    key = jax.random.PRNGKey(0)
    k_x, k_x2, k_p = jax.random.split(key, 3)

    in_size, hidden_size = 32, 32
    w1, b1, w2, b2 = init_params(k_p, in_size, hidden_size)

    # 1) Small batch: single full-array tile (exact module semantics, f32).
    batch = 8
    x = jax.random.normal(k_x, (batch, in_size), jnp.float32)
    out = jax.block_until_ready(map_pred_forward(x, w1, b1, w2, b2))
    ref = _ref_forward(x, w1, b1, w2, b2)
    assert out.shape == (batch,)
    assert jnp.allclose(out, ref, atol=1e-4, rtol=1e-4)

    # 2) Multi-tile with a partial last block (no wrapper jnp.pad of x): exercises
    #    the batch grid, resident weights, and the tail-slice correctness invariant.
    batch2 = 300
    x2 = jax.random.normal(k_x2, (batch2, in_size), jnp.float32)
    out2 = jax.block_until_ready(map_pred_forward(x2, w1, b1, w2, b2, max_tile_b=128))
    ref2 = _ref_forward(x2, w1, b1, w2, b2)
    assert out2.shape == (batch2,)
    assert jnp.allclose(out2, ref2, atol=1e-4, rtol=1e-4)

    # 3) x already bf16 upstream: kernel uses bf16 MXU inputs (w1 cast to match),
    #    f32 accumulation / bias / ReLU / layer 2.  No wrapper cast of x.
    x2b = x2.astype(jnp.bfloat16)
    out3 = jax.block_until_ready(map_pred_forward(x2b, w1, b1, w2, b2, max_tile_b=128))
    ref3 = _ref_forward(x2b.astype(jnp.float32),
                        w1.astype(jnp.bfloat16).astype(jnp.float32), b1, w2, b2)
    assert out3.shape == (batch2,)
    assert jnp.allclose(out3, ref3, atol=2e-3, rtol=2e-3)

    print("KERNEL_OK")
</pallas_src>

<mosaic_0001>
module attributes {stable_mosaic.version = 11 : i64} {
  func.func @map_pred_kernel(%arg0: i32, %arg1: memref<8x32xf32, #tpu.memory_space<vmem>>, %arg2: memref<32x32xf32, #tpu.memory_space<vmem>>, %arg3: memref<1x32xf32, #tpu.memory_space<vmem>>, %arg4: memref<1x32xf32, #tpu.memory_space<vmem>>, %arg5: memref<1x1xf32, #tpu.memory_space<smem>>, %arg6: memref<1x8xf32, #tpu.memory_space<vmem>>) attributes {dimension_semantics = [#tpu.dimension_semantics<parallel>], iteration_bounds = array<i64: 1>, scalar_prefetch = 0 : i64, scratch_operands = 0 : i64, tpu.core_type = #tpu.core_type<tc>, window_params = [{transform_indices = @transform_0, window_bounds = array<i64: 8, 32>}, {pipeline_mode = #tpu.pipeline_mode<synchronous>, transform_indices = @transform_1, window_bounds = array<i64: 32, 32>}, {pipeline_mode = #tpu.pipeline_mode<synchronous>, transform_indices = @transform_2, window_bounds = array<i64: 1, 32>}, {pipeline_mode = #tpu.pipeline_mode<synchronous>, transform_indices = @transform_3, window_bounds = array<i64: 1, 32>}, {transform_indices = @transform_4, window_bounds = array<i64: 1, 1>}, {transform_indices = @transform_5, window_bounds = array<i64: 1, 8>}]} {
    %c0 = arith.constant 0 : index
    %c0_0 = arith.constant 0 : index
    %0 = vector.load %arg1[%c0, %c0_0] : memref<8x32xf32, #tpu.memory_space<vmem>>, vector<8x32xf32>
    %c0_1 = arith.constant 0 : index
    %c0_2 = arith.constant 0 : index
    %1 = vector.load %arg2[%c0_1, %c0_2] : memref<32x32xf32, #tpu.memory_space<vmem>>, vector<32x32xf32>
    %cst = arith.constant dense<0.000000e+00> : vector<8x32xf32>
    %2 = tpu.matmul %0, %1, %cst {dimension_numbers = #tpu.dot_dimension_numbers<[1], [0], [0], [1], [0, 0, 1, 1], [], []>} : vector<8x32xf32>, vector<32x32xf32>, vector<8x32xf32> -> vector<8x32xf32>
    %c0_3 = arith.constant 0 : index
    %c0_4 = arith.constant 0 : index
    %3 = vector.load %arg3[%c0_3, %c0_4] : memref<1x32xf32, #tpu.memory_space<vmem>>, vector<1x32xf32>
    %4 = vector.broadcast %3 : vector<1x32xf32> to vector<8x32xf32>
    %5 = arith.addf %2, %4 : vector<8x32xf32>
    %cst_5 = arith.constant 0.000000e+00 : f32
    %6 = vector.broadcast %cst_5 : f32 to vector<8x32xf32>
    %7 = arith.maximumf %5, %6 : vector<8x32xf32>
    %c0_6 = arith.constant 0 : index
    %c0_7 = arith.constant 0 : index
    %8 = vector.load %arg4[%c0_6, %c0_7] : memref<1x32xf32, #tpu.memory_space<vmem>>, vector<1x32xf32>
    %cst_8 = arith.constant dense<0.000000e+00> : vector<1x8xf32>
    %9 = tpu.matmul %8, %7, %cst_8 {dimension_numbers = #tpu.dot_dimension_numbers<[1], [1], [0], [0], [0, 0, 1, 0], [], []>} : vector<1x32xf32>, vector<8x32xf32>, vector<1x8xf32> -> vector<1x8xf32>
    %c0_9 = arith.constant 0 : index
    %c0_10 = arith.constant 0 : index
    %10 = memref.load %arg5[%c0_9, %c0_10] : memref<1x1xf32, #tpu.memory_space<smem>>
    %11 = vector.broadcast %10 : f32 to vector<1x8xf32>
    %12 = arith.addf %9, %11 : vector<1x8xf32>
    %c0_11 = arith.constant 0 : index
    %c0_12 = arith.constant 0 : index
    %13 = vector.load %arg6[%c0_11, %c0_12] : memref<1x8xf32, #tpu.memory_space<vmem>>, vector<1x8xf32>
    tpu.vector_store %arg6[%c0_11, %c0_12], %12 {strides = array<i32>} : memref<1x8xf32, #tpu.memory_space<vmem>>, vector<1x8xf32>,
    return
  }
  func.func @transform_0(%arg0: i32) -> (i32, i32) {
    %c0_i32 = arith.constant 0 : i32
    %c0_i32_0 = arith.constant 0 : i32
    return %arg0, %c0_i32 : i32, i32
  }
  func.func @transform_1(%arg0: i32) -> (i32, i32) {
    %c0_i32 = arith.constant 0 : i32
    %c0_i32_0 = arith.constant 0 : i32
    %c0_i32_1 = arith.constant 0 : i32
    return %c0_i32, %c0_i32_0 : i32, i32
  }
  func.func @transform_2(%arg0: i32) -> (i32, i32) {
    %c0_i32 = arith.constant 0 : i32
    %c0_i32_0 = arith.constant 0 : i32
    %c0_i32_1 = arith.constant 0 : i32
    return %c0_i32, %c0_i32_0 : i32, i32
  }
  func.func @transform_3(%arg0: i32) -> (i32, i32) {
    %c0_i32 = arith.constant 0 : i32
    %c0_i32_0 = arith.constant 0 : i32
    %c0_i32_1 = arith.constant 0 : i32
    return %c0_i32, %c0_i32_0 : i32, i32
  }
  func.func @transform_4(%arg0: i32) -> (i32, i32) {
    %c0_i32 = arith.constant 0 : i32
    %c0_i32_0 = arith.constant 0 : i32
    %c0_i32_1 = arith.constant 0 : i32
    return %c0_i32, %c0_i32_0 : i32, i32
  }
  func.func @transform_5(%arg0: i32) -> (i32, i32) {
    %c0_i32 = arith.constant 0 : i32
    %c0_i32_0 = arith.constant 0 : i32
    return %c0_i32, %arg0 : i32, i32
  }
}

</mosaic_0001>

<llo_original>
// kernel: tpu_custom_call.1
$region0: #{tpu_custom_call.1}
  #allocation0 [shape = 'u32[]', space=smem, size = 0x4, offset = 0x4, fixed_abs, tag = 'smem constant byte address 0x4 - core index']
  #allocation1 [shape = 'u32[144,128]{1,0:T(1,128)}', space=vmem, size = 0x12000, scoped, tag = 'internal scratch']
  #allocation2 [shape = 'f32[1,1]{1,0:T(1,128)S(6)}', space=smem, size = 0x200, scoped, tag = 'scoped memory for tpu_custom_call.1']
  %s0 = inlined_call_operand.hbm [shape: f32[8,32], index: 0, kind: input, shape index: {}]
  %s1 = inlined_call_operand.hbm [shape: f32[32,32], index: 1, kind: input, shape index: {}]
  %s2 = inlined_call_operand.vmem [shape: f32[1,32], index: 2, kind: input, shape index: {}]
  %s3 = inlined_call_operand.vmem [shape: f32[1,32], index: 3, kind: input, shape index: {}]
  %s4 = inlined_call_operand.<no memory space> [shape: f32[1,1], index: 4, kind: input, shape index: {}]
  %s5 = inlined_call_operand.hbm [shape: f32[1,8], index: 5, kind: output, shape index: {}]
  %s6 = sld [smem:[#allocation0]]
  $region38: #{tpu_custom_call.1} parent=0
    _
  %s8 = ssub.s32 1, %s6
  %s9 = scalar_select 0, %s8, %s6
  %10 = sst [smem:[#allocation2]] %s4
  $region1: #{tpu_custom_call.1} parent=0
    #allocation3 [shape = 'u8[4096]{0}', space=vmem, size = 0x1000, scoped, tag = 'input window, operand 0, single buffered']
    #allocation4 [shape = 's32[1]{0}', space=sflag, size = 0x4, scoped, tag = 'scoped memory for tpu_custom_call.1']
    #allocation5 [shape = 's32[1]{0}', space=sflag, size = 0x4, scoped, tag = 'scoped memory for tpu_custom_call.1']
    #allocation6 [shape = 'u8[16384]{0}', space=vmem, size = 0x4000, scoped, tag = 'input window, operand 1, single buffered']
    #allocation7 [shape = 's32[1]{0}', space=sflag, size = 0x4, scoped, tag = 'scoped memory for tpu_custom_call.1']
    #allocation8 [shape = 'u8[512]{0}', space=vmem, size = 0x400, scoped, tag = 'output window, operand 0, single buffered']
    %11 = vsyncpa [#allocation4], 0
    %12 = vsyncpa [#allocation7], 0
    %13 = vsyncpa [#allocation5], 0
    // Predicated region
    $region2: #{tpu_custom_call.1} parent=1 // pred_check
      _
    $region3: #{tpu_custom_call.1} parent=1 // pred_check_branch
      %15 = sbr.rel (0) target = $region5
    $region4: #{tpu_custom_call.1} parent=1 // pred_region
      %s17 = ssub.s32 128, 128
      %18 = vsyncadd [#allocation4], %s17
      %s20 = sshll.u32 [#allocation3], 4
      %s21 = int_to_ptr.vmem [resolvable:$true] %s20
      %23 = dma.hbm_to_vmem [thread:$0]  %s0, 128, %s21, [#allocation4]
    $region5: #{tpu_custom_call.1} parent=1 // pred_fallthru
      _
    // Predicated region
    $region6: #{tpu_custom_call.1} parent=1 // pred_check
      _
    $region7: #{tpu_custom_call.1} parent=1 // pred_check_branch
      %25 = sbr.rel (0) target = $region9
    $region8: #{tpu_custom_call.1} parent=1 // pred_region
      %s27 = ssub.s32 512, 512
      %28 = vsyncadd [#allocation7], %s27
      %s29 = sshll.u32 [#allocation6], 4
      %s30 = int_to_ptr.vmem [resolvable:$true] %s29
      %35 = dma.hbm_to_vmem [thread:$0]  %s1, 512, %s30, [#allocation7], 128, 128, 8
    $region9: #{tpu_custom_call.1} parent=1 // pred_fallthru
      _
    // Predicated region
    $region10: #{tpu_custom_call.1} parent=1 // pred_check
      _
    $region11: #{tpu_custom_call.1} parent=1 // pred_check_branch
      %37 = sbr.rel (0) target = $region13
    $region12: #{tpu_custom_call.1} parent=1 // pred_region
      _
    $region13: #{tpu_custom_call.1} parent=1 // pred_fallthru
      _
    // Predicated region
    $region14: #{tpu_custom_call.1} parent=1 // pred_check
      _
    $region15: #{tpu_custom_call.1} parent=1 // pred_check_branch
      %39 = sbr.rel (0) target = $region17
    $region16: #{tpu_custom_call.1} parent=1 // pred_region
      _
    $region17: #{tpu_custom_call.1} parent=1 // pred_fallthru
      _
    // Predicated region
    $region18: #{tpu_custom_call.1} parent=1 // pred_check
      _
    $region19: #{tpu_custom_call.1} parent=1 // pred_check_branch
      %41 = sbr.rel (0) target = $region21
    $region20: #{tpu_custom_call.1} parent=1 // pred_region
      _
    $region21: #{tpu_custom_call.1} parent=1 // pred_fallthru
      _
    // Predicated region
    $region22: #{tpu_custom_call.1} parent=1 // pred_check
      _
    $region23: #{tpu_custom_call.1} parent=1 // pred_check_branch
      %43 = sbr.rel (0) target = $region25
    $region24: #{tpu_custom_call.1} parent=1 // pred_region
      %44 = dma.done [#allocation4], 128
    $region25: #{tpu_custom_call.1} parent=1 // pred_fallthru
      _
    // Predicated region
    $region26: #{tpu_custom_call.1} parent=1 // pred_check
      _
    $region27: #{tpu_custom_call.1} parent=1 // pred_check_branch
      %46 = sbr.rel (0) target = $region29
    $region28: #{tpu_custom_call.1} parent=1 // pred_region
      %47 = dma.done [#allocation7], 512
    $region29: #{tpu_custom_call.1} parent=1 // pred_fallthru
      _
    %v48 = vld [vmem:[#allocation3] sm:$0xff]
    %v49 = vld [vmem:[#allocation6] sm:$0xff]
    %v50 = vld [vmem:[#allocation6 + $0x8] sm:$0xff]
    %v51 = vld [vmem:[#allocation6 + $0x10] sm:$0xff]
    %v52 = vld [vmem:[#allocation6 + $0x18] sm:$0xff]
    %v53 = vld [vmem:[%s2] sm:$0x1]
    %v55 = vlaneseq
    %v56 = vshrl.u32 %v55, 7
    %v57 = vsub.s32 0, %v56
    %v58 = vrot.slane %v53, %v57
    %vm60 = vcmask 261120
    %v62 = vsel %vm60, %v48, 0
    %64 = vmatprep.subr.mxu0 0.0
    %65 = vmatpush1.msra.mxu0 0.0
    %66 = vmatprep.subr.mxu0 0.0
    %67 = vmatpush1.msra.mxu0 0.0
    %68 = vmatprep.subr.mxu0 0.0
    %69 = vmatpush1.msra.mxu0 0.0
    %70 = vmatprep.subr.mxu0 0.0
    %71 = vmatpush1.msra.mxu0 0.0
    %72 = vmatprep.subr.mxu0 0.0
    %73 = vmatpush1.msra.mxu0 0.0
    %74 = vmatprep.subr.mxu0 0.0
    %75 = vmatpush1.msra.mxu0 0.0
    %76 = vmatprep.subr.mxu0 0.0
    %77 = vmatpush1.msra.mxu0 0.0
    %78 = vmatprep.subr.mxu0 0.0
    %79 = vmatpush1.msra.mxu0 0.0
    %80 = vmatprep.subr.mxu0 0.0
    %81 = vmatpush1.msra.mxu0 0.0
    %82 = vmatprep.subr.mxu0 0.0
    %83 = vmatpush1.msra.mxu0 0.0
    %84 = vmatprep.subr.mxu0 0.0
    %85 = vmatpush1.msra.mxu0 0.0
    %86 = vmatprep.subr.mxu0 0.0
    %87 = vmatpush1.msra.mxu0 0.0
    %88 = vmatprep.subr.mxu0 0.0
    %89 = vmatpush1.msra.mxu0 %v52
    %90 = vmatprep.subr.mxu0 0.0
    %91 = vmatpush1.msra.mxu0 %v51
    %92 = vmatprep.subr.mxu0 0.0
    %93 = vmatpush1.msra.mxu0 %v50
    %94 = vmatprep.subr.mxu0 0.0
    %95 = vmatpush1.msra.mxu0 %v49
    %96 = vmatprep.subr.mxu0 0.0
    %97 = vmatpush2.msra.mxu0 0.0
    %98 = vmatprep.subr.mxu0 0.0
    %99 = vmatpush2.msra.mxu0 0.0
    %100 = vmatprep.subr.mxu0 0.0
    %101 = vmatpush2.msra.mxu0 0.0
    %102 = vmatprep.subr.mxu0 0.0
    %103 = vmatpush2.msra.mxu0 0.0
    %104 = vmatprep.subr.mxu0 0.0
    %105 = vmatpush2.msra.mxu0 0.0
    %106 = vmatprep.subr.mxu0 0.0
    %107 = vmatpush2.msra.mxu0 0.0
    %108 = vmatprep.subr.mxu0 0.0
    %109 = vmatpush2.msra.mxu0 0.0
    %110 = vmatprep.subr.mxu0 0.0
    %111 = vmatpush2.msra.mxu0 0.0
    %112 = vmatprep.subr.mxu0 0.0
    %113 = vmatpush2.msra.mxu0 0.0
    %114 = vmatprep.subr.mxu0 0.0
    %115 = vmatpush2.msra.mxu0 0.0
    %116 = vmatprep.subr.mxu0 0.0
    %117 = vmatpush2.msra.mxu0 0.0
    %118 = vmatprep.subr.mxu0 0.0
    %119 = vmatpush2.msra.mxu0 0.0
    %120 = vmatprep.subr.mxu0 0.0
    %121 = vmatpush2.msra.mxu0 0.0
    %122 = vmatprep.subr.mxu0 0.0
    %123 = vmatpush2.msra.mxu0 0.0
    %124 = vmatprep.subr.mxu0 0.0
    %125 = vmatpush2.msra.mxu0 0.0
    %126 = vmatprep.subr.mxu0 0.0
    %127 = vmatpush2.msra.mxu0 0.0
    %128 = vmatprep.mubr.f32.mxu0 0.0
    %129 = vmatmul.mubr.f32.gmra.mxu0 %v62
    %v130 = vpop.f32.mrf.mxu0
    %v131 = vadd.f32 %v58, %v130
    %v132 = vpop.f32.mrf.mxu0
    %133 = vdwg.mxu0
    %v134 = vmax.f32 %v131, 0.0
    %v135 = vld [vmem:[%s3] sm:$0x1]
    %s136 = sld [smem:[#allocation2]]
    %v137 = vstv %s136
    %v139 = vsel %vm60, %v135, 0
    %v142 = vsel %vm60, %v134, 0
    %144 = vmatprep.subr.mxu0 0.0
    %145 = vmatpush1.xpose.msra.mxu0 0.0
    %146 = vmatprep.subr.mxu0 0.0
    %147 = vmatpush1.xpose.msra.mxu0 0.0
    %148 = vmatprep.subr.mxu0 0.0
    %149 = vmatpush1.xpose.msra.mxu0 0.0
    %150 = vmatprep.subr.mxu0 0.0
    %151 = vmatpush1.xpose.msra.mxu0 0.0
    %152 = vmatprep.subr.mxu0 0.0
    %153 = vmatpush1.xpose.msra.mxu0 0.0
    %154 = vmatprep.subr.mxu0 0.0
    %155 = vmatpush1.xpose.msra.mxu0 0.0
    %156 = vmatprep.subr.mxu0 0.0
    %157 = vmatpush1.xpose.msra.mxu0 0.0
    %158 = vmatprep.subr.mxu0 0.0
    %159 = vmatpush1.xpose.msra.mxu0 0.0
    %160 = vmatprep.subr.mxu0 0.0
    %161 = vmatpush1.xpose.msra.mxu0 0.0
    %162 = vmatprep.subr.mxu0 0.0
    %163 = vmatpush1.xpose.msra.mxu0 0.0
    %164 = vmatprep.subr.mxu0 0.0
    %165 = vmatpush1.xpose.msra.mxu0 0.0
    %166 = vmatprep.subr.mxu0 0.0
    %167 = vmatpush1.xpose.msra.mxu0 0.0
    %168 = vmatprep.subr.mxu0 0.0
    %169 = vmatpush1.xpose.msra.mxu0 0.0
    %170 = vmatprep.subr.mxu0 0.0
    %171 = vmatpush1.xpose.msra.mxu0 0.0
    %172 = vmatprep.subr.mxu0 0.0
    %173 = vmatpush1.xpose.msra.mxu0 0.0
    %174 = vmatprep.subr.mxu0 0.0
    %175 = vmatpush1.xpose.msra.mxu0 %v142
    %176 = vmatprep.subr.mxu0 0.0
    %177 = vmatpush2.xpose.msra.mxu0 0.0
    %178 = vmatprep.subr.mxu0 0.0
    %179 = vmatpush2.xpose.msra.mxu0 0.0
    %180 = vmatprep.subr.mxu0 0.0
    %181 = vmatpush2.xpose.msra.mxu0 0.0
    %182 = vmatprep.subr.mxu0 0.0
    %183 = vmatpush2.xpose.msra.mxu0 0.0
    %184 = vmatprep.subr.mxu0 0.0
    %185 = vmatpush2.xpose.msra.mxu0 0.0
    %186 = vmatprep.subr.mxu0 0.0
    %187 = vmatpush2.xpose.msra.mxu0 0.0
    %188 = vmatprep.subr.mxu0 0.0
    %189 = vmatpush2.xpose.msra.mxu0 0.0
    %190 = vmatprep.subr.mxu0 0.0
    %191 = vmatpush2.xpose.msra.mxu0 0.0
    %192 = vmatprep.subr.mxu0 0.0
    %193 = vmatpush2.xpose.msra.mxu0 0.0
    %194 = vmatprep.subr.mxu0 0.0
    %195 = vmatpush2.xpose.msra.mxu0 0.0
    %196 = vmatprep.subr.mxu0 0.0
    %197 = vmatpush2.xpose.msra.mxu0 0.0
    %198 = vmatprep.subr.mxu0 0.0
    %199 = vmatpush2.xpose.msra.mxu0 0.0
    %200 = vmatprep.subr.mxu0 0.0
    %201 = vmatpush2.xpose.msra.mxu0 0.0
    %202 = vmatprep.subr.mxu0 0.0
    %203 = vmatpush2.xpose.msra.mxu0 0.0
    %204 = vmatprep.subr.mxu0 0.0
    %205 = vmatpush2.xpose.msra.mxu0 0.0
    %206 = vmatprep.subr.mxu0 0.0
    %207 = vmatpush2.xpose.msra.mxu0 0.0
    %208 = vmatprep.mubr.f32.mxu0 0.0
    %209 = vmatmul.mubr.f32.gmra.mxu0 %v139
    %v210 = vpop.f32.mrf.mxu0
    %v211 = vadd.f32 %v137, %v210
    %v212 = vpop.f32.mrf.mxu0
    %213 = vdwg.mxu0
    %vm214 = vcmask 57344
    %215 = vst.msk [vmem:[#allocation8] sm:$0x1] %vm214, %v211
    // Predicated region
    $region30: #{tpu_custom_call.1} parent=1 // pred_check
      _
    $region31: #{tpu_custom_call.1} parent=1 // pred_check_branch
      %217 = sbr.rel (0) target = $region33
    $region32: #{tpu_custom_call.1} parent=1 // pred_region
      %s219 = ssub.s32 16, 16
      %220 = vsyncadd [#allocation5], %s219
      %s222 = sshll.u32 [#allocation8], 4
      %s223 = int_to_ptr.vmem [resolvable:$true] %s222
      %225 = dma.vmem_to_hbm [thread:$0]  %s223, 16, %s5, [#allocation5]
    $region33: #{tpu_custom_call.1} parent=1 // pred_fallthru
      _
    // Predicated region
    $region34: #{tpu_custom_call.1} parent=1 // pred_check
      _
    $region35: #{tpu_custom_call.1} parent=1 // pred_check_branch
      %227 = sbr.rel (0) target = $region37
    $region36: #{tpu_custom_call.1} parent=1 // pred_region
      %228 = dma.done [#allocation5], 16
    $region37: #{tpu_custom_call.1} parent=1 // pred_fallthru
      _
    %229 = vsyncpa [#allocation4], 1
    %230 = vsyncpa [#allocation7], 1
    %231 = vsyncpa [#allocation5], 1

</llo_original>
